<compile_context>
chip_gen: v5e
topology: v5e:2x2
jax: 0.10.0
libtpu: 0.0.40
codegen_flags: <defaults>
</compile_context>

<pallas_src>
import jax
import jax.numpy as jnp
from jax.experimental import pallas as pl
from jax.experimental.pallas import tpu as pltpu


def _round_up(x, m):
    return ((x + m - 1) // m) * m


def _erf_f32(x):
    # Abramowitz & Stegun 7.1.26 rational approximation of erf(x),
    # |error| <= 1.5e-7 (exact at float32 precision). Only exp/mul/div,
    # which lower cleanly to the EUP/VPU.
    p = 0.3275911
    a1, a2, a3, a4, a5 = (0.254829592, -0.284496736, 1.421413741,
                          -1.453152027, 1.061405429)
    ax = jnp.abs(x)
    t = 1.0 / (1.0 + p * ax)
    poly = ((((a5 * t + a4) * t + a3) * t + a2) * t + a1) * t
    y = 1.0 - poly * jnp.exp(-(ax * ax))
    return jnp.where(x >= 0, y, -y)


def _gelu_exact(x):
    # PyTorch nn.GELU() default: 0.5 * x * (1 + erf(x / sqrt(2)))
    return 0.5 * x * (1.0 + _erf_f32(x * 0.7071067811865476))


def _fused_mlp_kernel(x_ref, w1_ref, b1_ref, w2_ref, b2_ref, o_ref, acc_ref):
    """One grid step: h_blk = GELU(x_blk @ W1[:, hb] + b1[hb]) in VMEM,
    then acc += h_blk @ W2[hb, :]. Epilogue adds b2 and stores."""
    hb = pl.program_id(1)

    @pl.when(hb == 0)
    def _init():
        acc_ref[...] = jnp.zeros_like(acc_ref)

    # fc1 partial on the MXU (operands bf16 or f32, f32 accumulation).
    h = jnp.dot(x_ref[...], w1_ref[...], preferred_element_type=jnp.float32)
    # Bias + exact GELU, f32, entirely in VMEM -- h never goes to HBM.
    h = _gelu_exact(h + b1_ref[...])
    # fc2 partial into the resident f32 output accumulator.
    acc_ref[...] += jnp.dot(h.astype(w2_ref.dtype), w2_ref[...],
                            preferred_element_type=jnp.float32)

    @pl.when(hb == pl.num_programs(1) - 1)
    def _epilogue():
        o_ref[...] = (acc_ref[...] + b2_ref[...]).astype(o_ref.dtype)


def prepare_mlp_params(w1_pt, b1, w2_pt, b2, *,
                       compute_dtype=jnp.bfloat16, th=512):
    """One-time weight preparation (call at init, NOT per forward):
    transpose PyTorch (out,in) weights to (in,out), zero-pad K/H/N to
    128-aligned extents and cast to the MXU compute dtype."""
    d_hid, d_in = w1_pt.shape
    d_out, d_hid2 = w2_pt.shape
    assert d_hid == d_hid2 and b1.shape == (d_hid,) and b2.shape == (d_out,)

    cdt = jnp.dtype(compute_dtype)
    Kp = _round_up(d_in, 128)
    th = min(th, _round_up(d_hid, 128))
    Hp = _round_up(d_hid, th)
    Np = _round_up(d_out, 128)

    w1 = jnp.pad(w1_pt.T.astype(cdt), ((0, Kp - d_in), (0, Hp - d_hid)))
    w2 = jnp.pad(w2_pt.T.astype(cdt), ((0, Hp - d_hid), (0, Np - d_out)))
    b1p = jnp.pad(b1.astype(jnp.float32).reshape(1, d_hid),
                  ((0, 0), (0, Hp - d_hid)))
    b2p = jnp.pad(b2.astype(jnp.float32).reshape(1, d_out),
                  ((0, 0), (0, Np - d_out)))

    return dict(w1=w1, b1=b1p, w2=w2, b2=b2p,
                d_in=d_in, d_hid=d_hid, d_out=d_out,
                Kp=Kp, Hp=Hp, Np=Np, th=th, compute_dtype=cdt)


def mlp_forward(x, params, *, tm=256, out_dtype=None, vmem_limit_bytes=None):
    """Fused Mlp forward.  x: (..., in_features).  `params` comes from
    prepare_mlp_params (weights already transposed/padded/cast)."""
    *lead, d_in = x.shape
    assert d_in == params["d_in"], (d_in, params["d_in"])
    out_dtype = out_dtype or x.dtype
    cdt = params["compute_dtype"]
    Kp, Hp, Np, th = params["Kp"], params["Hp"], params["Np"], params["th"]
    d_out = params["d_out"]

    M = 1
    for d in lead:
        M *= d
    x2 = x.reshape(M, d_in)

    # M tiling: clamp to the (padded) row count, and make sure there are at
    # least two M blocks whenever possible so the "parallel" axis keeps both
    # v7x TensorCores busy.
    tm = min(tm, _round_up(M, 8))
    if M >= 16 and _round_up(M, tm) // tm < 2:
        tm = _round_up((M + 1) // 2, 8)
    Mp = _round_up(M, tm)

    # Pad/cast the activation only when actually needed.
    if x2.dtype != cdt:
        x2 = x2.astype(cdt)
    if (Mp, Kp) != (M, d_in):
        x2 = jnp.pad(x2, ((0, Mp - M), (0, Kp - d_in)))

    grid = (Mp // tm, Hp // th)
    n_mblk = grid[0]
    w_bytes = (Kp * Hp + Hp * Np) * cdt.itemsize
    cost = pl.CostEstimate(
        flops=2 * Mp * Hp * (Kp + Np),
        transcendentals=Mp * Hp,
        bytes_accessed=(Mp * Kp * cdt.itemsize
                        + n_mblk * w_bytes
                        + Mp * Np * jnp.dtype(out_dtype).itemsize),
    )

    compiler_params = pltpu.CompilerParams(
        dimension_semantics=("parallel", "arbitrary"),
        vmem_limit_bytes=vmem_limit_bytes,
    )

    out = pl.pallas_call(
        _fused_mlp_kernel,
        out_shape=jax.ShapeDtypeStruct((Mp, Np), out_dtype),
        grid=grid,
        in_specs=[
            pl.BlockSpec((tm, Kp), lambda i, h: (i, 0)),   # x row block, full K1
            pl.BlockSpec((Kp, th), lambda i, h: (0, h)),   # W1 column block
            pl.BlockSpec((1, th), lambda i, h: (0, h)),    # b1 slice
            pl.BlockSpec((th, Np), lambda i, h: (h, 0)),   # W2 row block, full N
            pl.BlockSpec((1, Np), lambda i, h: (0, 0)),    # b2 (epilogue only)
        ],
        out_specs=pl.BlockSpec((tm, Np), lambda i, h: (i, 0)),
        scratch_shapes=[pltpu.VMEM((tm, Np), jnp.float32)],
        compiler_params=compiler_params,
        cost_estimate=cost,
    )(x2, params["w1"], params["b1"], params["w2"], params["b2"])

    return out[:M, :d_out].reshape(*lead, d_out)
    # TODO(synk): training-mode Dropout (p > 0) RNG masking not implemented;
    # the module's default drop=0.0 makes it an identity here.


if __name__ == "__main__":
    # Small shapes consistent with the module: batch=2, seq=8,
    # in_features=32, hidden_features=128, out_features=in_features.
    B, S = 2, 8
    D_IN, D_HID = 32, 128
    D_OUT = D_IN

    key = jax.random.PRNGKey(0)
    kx, kw1, kb1, kw2, kb2 = jax.random.split(key, 5)
    x = jax.random.normal(kx, (B, S, D_IN), dtype=jnp.float32)
    # PyTorch nn.Linear stores weight as (out_features, in_features).
    w1_pt = jax.random.normal(kw1, (D_HID, D_IN), dtype=jnp.float32) * 0.02
    b1 = jax.random.normal(kb1, (D_HID,), dtype=jnp.float32) * 0.02
    w2_pt = jax.random.normal(kw2, (D_OUT, D_HID), dtype=jnp.float32) * 0.02
    b2 = jax.random.normal(kb2, (D_OUT,), dtype=jnp.float32) * 0.02

    # f32-compute path: tight numerics check against the PyTorch forward.
    params_f32 = prepare_mlp_params(w1_pt, b1, w2_pt, b2,
                                    compute_dtype=jnp.float32)
    out = jax.block_until_ready(mlp_forward(x, params_f32))

    # Plain-JAX reference (exact erf GELU, Dropout(0.0) == identity).
    h_ref = jnp.einsum("bsd,hd->bsh", x, w1_pt) + b1
    h_ref = 0.5 * h_ref * (1.0 + jax.lax.erf(h_ref * 0.7071067811865476))
    ref = jnp.einsum("bsh,oh->bso", h_ref, w2_pt) + b2

    assert out.shape == (B, S, D_OUT), out.shape
    max_err = float(jnp.max(jnp.abs(out - ref)))
    assert jnp.allclose(out, ref, atol=1e-4, rtol=1e-4), max_err

    # Also exercise the default bf16-operand / f32-accumulate MXU path.
    params_bf16 = prepare_mlp_params(w1_pt, b1, w2_pt, b2)  # bf16 default
    out_bf16 = jax.block_until_ready(mlp_forward(x, params_bf16))
    assert out_bf16.shape == (B, S, D_OUT), out_bf16.shape
    assert bool(jnp.all(jnp.isfinite(out_bf16)))

    print("KERNEL_OK")
</pallas_src>

<mosaic_0001>
module attributes {stable_mosaic.version = 11 : i64} {
  func.func @_fused_mlp_kernel(%arg0: i32, %arg1: i32, %arg2: memref<8x128xf32, #tpu.memory_space<vmem>>, %arg3: memref<128x128xf32, #tpu.memory_space<vmem>>, %arg4: memref<1x128xf32, #tpu.memory_space<vmem>>, %arg5: memref<128x128xf32, #tpu.memory_space<vmem>>, %arg6: memref<1x128xf32, #tpu.memory_space<vmem>>, %arg7: memref<8x128xf32, #tpu.memory_space<vmem>>, %arg8: memref<8x128xf32, #tpu.memory_space<vmem>>) attributes {dimension_semantics = [#tpu.dimension_semantics<parallel>, #tpu.dimension_semantics<arbitrary>], iteration_bounds = array<i64: 2, 1>, scalar_prefetch = 0 : i64, scratch_operands = 1 : i64, tpu.core_type = #tpu.core_type<tc>, window_params = [{transform_indices = @transform_0, window_bounds = array<i64: 8, 128>}, {transform_indices = @transform_1, window_bounds = array<i64: 128, 128>}, {transform_indices = @transform_2, window_bounds = array<i64: 1, 128>}, {transform_indices = @transform_3, window_bounds = array<i64: 128, 128>}, {pipeline_mode = #tpu.pipeline_mode<synchronous>, transform_indices = @transform_4, window_bounds = array<i64: 1, 128>}, {transform_indices = @transform_5, window_bounds = array<i64: 8, 128>}]} {
    %c0_i32 = arith.constant 0 : i32
    %0 = arith.cmpi eq, %arg1, %c0_i32 : i32
    %1 = arith.extui %0 : i1 to i32
    %c0_i32_0 = arith.constant 0 : i32
    %2 = arith.cmpi ne, %1, %c0_i32_0 : i32
    scf.if %2 {
      %cst_30 = arith.constant 0.000000e+00 : f32
      %57 = vector.broadcast %cst_30 : f32 to vector<8x128xf32>
      %c0_31 = arith.constant 0 : index
      %c0_32 = arith.constant 0 : index
      %58 = vector.load %arg8[%c0_31, %c0_32] : memref<8x128xf32, #tpu.memory_space<vmem>>, vector<8x128xf32>
      tpu.vector_store %arg8[%c0_31, %c0_32], %57 {strides = array<i32>} : memref<8x128xf32, #tpu.memory_space<vmem>>, vector<8x128xf32>,
    } else {
    }
    %c0 = arith.constant 0 : index
    %c0_1 = arith.constant 0 : index
    %3 = vector.load %arg2[%c0, %c0_1] : memref<8x128xf32, #tpu.memory_space<vmem>>, vector<8x128xf32>
    %c0_2 = arith.constant 0 : index
    %c0_3 = arith.constant 0 : index
    %4 = vector.load %arg3[%c0_2, %c0_3] : memref<128x128xf32, #tpu.memory_space<vmem>>, vector<128x128xf32>
    %cst = arith.constant dense<0.000000e+00> : vector<8x128xf32>
    %5 = tpu.matmul %3, %4, %cst {dimension_numbers = #tpu.dot_dimension_numbers<[1], [0], [0], [1], [0, 0, 1, 1], [], []>} : vector<8x128xf32>, vector<128x128xf32>, vector<8x128xf32> -> vector<8x128xf32>
    %c0_4 = arith.constant 0 : index
    %c0_5 = arith.constant 0 : index
    %6 = vector.load %arg4[%c0_4, %c0_5] : memref<1x128xf32, #tpu.memory_space<vmem>>, vector<1x128xf32>
    %7 = vector.broadcast %6 : vector<1x128xf32> to vector<8x128xf32>
    %8 = arith.addf %5, %7 : vector<8x128xf32>
    %cst_6 = arith.constant 5.000000e-01 : f32
    %9 = vector.broadcast %cst_6 : f32 to vector<8x128xf32>
    %10 = arith.mulf %9, %8 : vector<8x128xf32>
    %cst_7 = arith.constant 0.707106769 : f32
    %11 = vector.broadcast %cst_7 : f32 to vector<8x128xf32>
    %12 = arith.mulf %8, %11 : vector<8x128xf32>
    %13 = math.absf %12 : vector<8x128xf32>
    %cst_8 = arith.constant 0.327591091 : f32
    %14 = vector.broadcast %cst_8 : f32 to vector<8x128xf32>
    %15 = arith.mulf %14, %13 : vector<8x128xf32>
    %cst_9 = arith.constant 1.000000e+00 : f32
    %16 = vector.broadcast %cst_9 : f32 to vector<8x128xf32>
    %17 = arith.addf %16, %15 : vector<8x128xf32>
    %cst_10 = arith.constant 1.000000e+00 : f32
    %18 = vector.broadcast %cst_10 : f32 to vector<8x128xf32>
    %19 = arith.divf %18, %17 : vector<8x128xf32>
    %cst_11 = arith.constant 1.06140542 : f32
    %20 = vector.broadcast %cst_11 : f32 to vector<8x128xf32>
    %21 = arith.mulf %20, %19 : vector<8x128xf32>
    %cst_12 = arith.constant -1.45315206 : f32
    %22 = vector.broadcast %cst_12 : f32 to vector<8x128xf32>
    %23 = arith.addf %21, %22 : vector<8x128xf32>
    %24 = arith.mulf %23, %19 : vector<8x128xf32>
    %cst_13 = arith.constant 1.42141378 : f32
    %25 = vector.broadcast %cst_13 : f32 to vector<8x128xf32>
    %26 = arith.addf %24, %25 : vector<8x128xf32>
    %27 = arith.mulf %26, %19 : vector<8x128xf32>
    %cst_14 = arith.constant -0.284496725 : f32
    %28 = vector.broadcast %cst_14 : f32 to vector<8x128xf32>
    %29 = arith.addf %27, %28 : vector<8x128xf32>
    %30 = arith.mulf %29, %19 : vector<8x128xf32>
    %cst_15 = arith.constant 0.254829586 : f32
    %31 = vector.broadcast %cst_15 : f32 to vector<8x128xf32>
    %32 = arith.addf %30, %31 : vector<8x128xf32>
    %33 = arith.mulf %32, %19 : vector<8x128xf32>
    %34 = arith.mulf %13, %13 : vector<8x128xf32>
    %cst_16 = arith.constant 0.000000e+00 : f32
    %35 = vector.broadcast %cst_16 : f32 to vector<8x128xf32>
    %36 = arith.subf %35, %34 : vector<8x128xf32>
    %37 = math.exp %36 : vector<8x128xf32>
    %38 = arith.mulf %33, %37 : vector<8x128xf32>
    %cst_17 = arith.constant 1.000000e+00 : f32
    %39 = vector.broadcast %cst_17 : f32 to vector<8x128xf32>
    %40 = arith.subf %39, %38 : vector<8x128xf32>
    %cst_18 = arith.constant 0.000000e+00 : f32
    %41 = vector.broadcast %cst_18 : f32 to vector<8x128xf32>
    %42 = arith.cmpf oge, %12, %41 : vector<8x128xf32>
    %cst_19 = arith.constant 0.000000e+00 : f32
    %43 = vector.broadcast %cst_19 : f32 to vector<8x128xf32>
    %44 = arith.subf %43, %40 : vector<8x128xf32>
    %45 = arith.select %42, %40, %44 : vector<8x128xi1>, vector<8x128xf32>
    %cst_20 = arith.constant 1.000000e+00 : f32
    %46 = vector.broadcast %cst_20 : f32 to vector<8x128xf32>
    %47 = arith.addf %46, %45 : vector<8x128xf32>
    %48 = arith.mulf %10, %47 : vector<8x128xf32>
    %c0_21 = arith.constant 0 : index
    %c0_22 = arith.constant 0 : index
    %49 = vector.load %arg8[%c0_21, %c0_22] : memref<8x128xf32, #tpu.memory_space<vmem>>, vector<8x128xf32>
    %c0_23 = arith.constant 0 : index
    %c0_24 = arith.constant 0 : index
    %50 = vector.load %arg5[%c0_23, %c0_24] : memref<128x128xf32, #tpu.memory_space<vmem>>, vector<128x128xf32>
    %cst_25 = arith.constant dense<0.000000e+00> : vector<8x128xf32>
    %51 = tpu.matmul %48, %50, %cst_25 {dimension_numbers = #tpu.dot_dimension_numbers<[1], [0], [0], [1], [0, 0, 1, 1], [], []>} : vector<8x128xf32>, vector<128x128xf32>, vector<8x128xf32> -> vector<8x128xf32>
    %52 = arith.addf %49, %51 : vector<8x128xf32>
    %c0_26 = arith.constant 0 : index
    %c0_27 = arith.constant 0 : index
    %53 = vector.load %arg8[%c0_26, %c0_27] : memref<8x128xf32, #tpu.memory_space<vmem>>, vector<8x128xf32>
    tpu.vector_store %arg8[%c0_26, %c0_27], %52 {strides = array<i32>} : memref<8x128xf32, #tpu.memory_space<vmem>>, vector<8x128xf32>,
    %c0_i32_28 = arith.constant 0 : i32
    %54 = arith.cmpi eq, %arg1, %c0_i32_28 : i32
    %55 = arith.extui %54 : i1 to i32
    %c0_i32_29 = arith.constant 0 : i32
    %56 = arith.cmpi ne, %55, %c0_i32_29 : i32
    scf.if %56 {
      %c0_30 = arith.constant 0 : index
      %c0_31 = arith.constant 0 : index
      %57 = vector.load %arg8[%c0_30, %c0_31] : memref<8x128xf32, #tpu.memory_space<vmem>>, vector<8x128xf32>
      %c0_32 = arith.constant 0 : index
      %c0_33 = arith.constant 0 : index
      %58 = vector.load %arg6[%c0_32, %c0_33] : memref<1x128xf32, #tpu.memory_space<vmem>>, vector<1x128xf32>
      %59 = vector.broadcast %58 : vector<1x128xf32> to vector<8x128xf32>
      %60 = arith.addf %57, %59 : vector<8x128xf32>
      %c0_34 = arith.constant 0 : index
      %c0_35 = arith.constant 0 : index
      %61 = vector.load %arg7[%c0_34, %c0_35] : memref<8x128xf32, #tpu.memory_space<vmem>>, vector<8x128xf32>
      tpu.vector_store %arg7[%c0_34, %c0_35], %60 {strides = array<i32>} : memref<8x128xf32, #tpu.memory_space<vmem>>, vector<8x128xf32>,
    } else {
    }
    return
  }
  func.func @transform_0(%arg0: i32, %arg1: i32) -> (i32, i32) {
    %c0_i32 = arith.constant 0 : i32
    %c0_i32_0 = arith.constant 0 : i32
    return %arg0, %c0_i32 : i32, i32
  }
  func.func @transform_1(%arg0: i32, %arg1: i32) -> (i32, i32) {
    %c0_i32 = arith.constant 0 : i32
    %c0_i32_0 = arith.constant 0 : i32
    return %c0_i32, %arg1 : i32, i32
  }
  func.func @transform_2(%arg0: i32, %arg1: i32) -> (i32, i32) {
    %c0_i32 = arith.constant 0 : i32
    %c0_i32_0 = arith.constant 0 : i32
    return %c0_i32, %arg1 : i32, i32
  }
  func.func @transform_3(%arg0: i32, %arg1: i32) -> (i32, i32) {
    %c0_i32 = arith.constant 0 : i32
    %c0_i32_0 = arith.constant 0 : i32
    return %arg1, %c0_i32 : i32, i32
  }
  func.func @transform_4(%arg0: i32, %arg1: i32) -> (i32, i32) {
    %c0_i32 = arith.constant 0 : i32
    %c0_i32_0 = arith.constant 0 : i32
    %c0_i32_1 = arith.constant 0 : i32
    return %c0_i32, %c0_i32_0 : i32, i32
  }
  func.func @transform_5(%arg0: i32, %arg1: i32) -> (i32, i32) {
    %c0_i32 = arith.constant 0 : i32
    %c0_i32_0 = arith.constant 0 : i32
    return %arg0, %c0_i32 : i32, i32
  }
}

</mosaic_0001>

<llo_original>
// kernel: tpu_custom_call.1
$region0: #{tpu_custom_call.1}
  #allocation0 [shape = 'u32[]', space=smem, size = 0x4, offset = 0x4, fixed_abs, tag = 'smem constant byte address 0x4 - core index']
  #allocation1 [shape = 'u32[72,128]{1,0:T(1,128)}', space=vmem, size = 0x9000, scoped, tag = 'internal scratch']
  #allocation2 [shape = 'f32[8,128]{1,0:T(8,128)}', space=vmem, size = 0x1000, scoped, tag = 'scratch operand']
  %s0 = inlined_call_operand.hbm [shape: f32[16,128], index: 0, kind: input, shape index: {}]
  %s1 = inlined_call_operand.hbm [shape: f32[128,128], index: 1, kind: input, shape index: {}]
  %s2 = inlined_call_operand.vmem [shape: f32[1,128], index: 2, kind: input, shape index: {}]
  %s3 = inlined_call_operand.hbm [shape: f32[128,128], index: 3, kind: input, shape index: {}]
  %s4 = inlined_call_operand.vmem [shape: f32[1,128], index: 4, kind: input, shape index: {}]
  %s5 = inlined_call_operand.hbm [shape: f32[16,128], index: 5, kind: output, shape index: {}]
  %s6 = sld [smem:[#allocation0]]
  $region73: #{tpu_custom_call.1} parent=0
    _
  %s8 = ssub.s32 1, %s6
  %s9 = scalar_select 0, %s8, %s6
  $region1: #{tpu_custom_call.1} parent=0
    #allocation3 [shape = 'u8[8192]{0}', space=vmem, size = 0x2000, scoped, tag = 'input window, operand 0']
    #allocation4 [shape = 's32[2]{0}', space=sflag, size = 0x8, scoped, tag = 'scoped memory for tpu_custom_call.1']
    #allocation5 [shape = 's32[2]{0}', space=sflag, size = 0x8, scoped, tag = 'scoped memory for tpu_custom_call.1']
    #allocation6 [shape = 'u8[65536]{0}', space=vmem, size = 0x10000, scoped, tag = 'input window, operand 1, single buffered']
    #allocation7 [shape = 's32[1]{0}', space=sflag, size = 0x4, scoped, tag = 'scoped memory for tpu_custom_call.1']
    #allocation8 [shape = 'u8[65536]{0}', space=vmem, size = 0x10000, scoped, tag = 'input window, operand 3, single buffered']
    #allocation9 [shape = 'u8[8192]{0}', space=vmem, size = 0x2000, scoped, tag = 'output window, operand 0']
    %10 = vsyncpa [#allocation4], 0
    %s11 = scalar_lea.sflag [#allocation4], 1
    %12 = vsyncpa %s11, 0
    %13 = vsyncpa [#allocation7], 0
    %14 = vsyncpa [#allocation5], 0
    %s15 = scalar_lea.sflag [#allocation5], 1
    %16 = vsyncpa %s15, 0
    loop: start=0, step=1, limit=4
    $region2: #{tpu_custom_call.1} parent=1 // loop_pre_header
      _
    $region3: #{tpu_custom_call.1} parent=1 // loop_header
      %s18 = sphi 0, %s22
      %p19 = scmp.ge.s32.totalorder %s18, 4
      %s25 = sphi 0, %s37
      %s26 = sphi 0, %s33
      %s27 = sphi 0, %s25
      %s28 = sphi 0, %s26
      %s29 = sphi 0, %s27
      %s30 = sphi 0, %s28
      %s40 = sphi 0, %s42
      %s43 = sphi 0, %s40
      %s44 = sphi 0, %s43
      %s60 = sphi 0, %s44
      %s66 = sphi 0, %s68
      %s69 = sphi 0, %s66
      %s70 = sphi 0, %s69
      %s86 = sphi 0, %s70
      %s92 = sphi 0, %s94
      %s95 = sphi 0, %s92
      %s96 = sphi 0, %s95
      %s112 = sphi 0, %s96
      %s118 = sphi 0, %s120
      %s121 = sphi 0, %s118
      %s122 = sphi 0, %s121
      %s138 = sphi 0, %s122
      %s142 = sphi 0, %s142
      %s144 = sphi 0, %s142
      %s145 = sphi 0, %s144
      %s159 = sphi 0, %s145
      %s165 = sphi 0, %s167
      %s168 = sphi 0, %s165
      %s169 = sphi 0, %s168
      %s185 = sphi 0, %s169
    $region4: #{tpu_custom_call.1} parent=1 // loop_header_branch
      %21 = sbr.rel (%p19) target = $region8
    $region5: #{tpu_custom_call.1} parent=1 // loop_body
      %s23 = ssub.s32 %s18, 1
      %s24 = ssub.s32 %s18, 2
      %s31 = sadd.s32 1, %s26
      %p32 = scmp.ge.s32.totalorder %s31, 1
      %s33 = scalar_select %p32, 0, %s31
      %s34 = sadd.s32 1, %s25
      %s35 = scalar_select %p32, %s34, %s25
      %p36 = scmp.ge.s32.totalorder %s35, 2
      %s37 = scalar_select %p36, 0, %s35
      %s38 = ssub.s32 %s25, %s37
      %p39 = scmp.eq.s32.totalorder %s38, 0
      %s41 = sadd.s32 %s40, 1
      %s42 = scalar_select %p39, %s40, %s41
      %p45 = pneg %p39
      %p46 = scmp.eq.s32.totalorder %s18, 1
      %p47 = por %p45, %p46
      %p48 = scmp.ne.s32.totalorder %s40, %s43
      %p49 = scmp.eq.s32.totalorder %s18, 0
      %p50 = por %p48, %p49
      %p51 = scmp.ne.s32.totalorder %s40, %s43
      %p52 = scmp.eq.s32.totalorder %s23, 1
      %p53 = por %p51, %p52
      %p54 = scmp.ne.s32.totalorder %s43, %s44
      %p55 = scmp.eq.s32.totalorder %s23, 0
      %p56 = por %p54, %p55
      %p57 = scmp.ne.s32.totalorder %s43, %s44
      %p58 = scmp.eq.s32.totalorder %s24, 1
      %p59 = por %p57, %p58
      %p61 = scmp.ne.s32.totalorder %s44, %s60
      %p62 = scmp.eq.s32.totalorder %s24, 0
      %p63 = por %p61, %p62
      %s64 = ssub.s32 %s26, %s33
      %p65 = scmp.eq.s32.totalorder %s64, 0
      %s67 = sadd.s32 %s66, 1
      %s68 = scalar_select %p65, %s66, %s67
      %p71 = pneg %p65
      %p72 = scmp.eq.s32.totalorder %s18, 1
      %p73 = por %p71, %p72
      %p74 = scmp.ne.s32.totalorder %s66, %s69
      %p75 = scmp.eq.s32.totalorder %s18, 0
      %p76 = por %p74, %p75
      %p77 = scmp.ne.s32.totalorder %s66, %s69
      %p78 = scmp.eq.s32.totalorder %s23, 1
      %p79 = por %p77, %p78
      %p80 = scmp.ne.s32.totalorder %s69, %s70
      %p81 = scmp.eq.s32.totalorder %s23, 0
      %p82 = por %p80, %p81
      %p83 = scmp.ne.s32.totalorder %s69, %s70
      %p84 = scmp.eq.s32.totalorder %s24, 1
      %p85 = por %p83, %p84
      %p87 = scmp.ne.s32.totalorder %s70, %s86
      %p88 = scmp.eq.s32.totalorder %s24, 0
      %p89 = por %p87, %p88
      %s90 = ssub.s32 %s26, %s33
      %p91 = scmp.eq.s32.totalorder %s90, 0
      %s93 = sadd.s32 %s92, 1
      %s94 = scalar_select %p91, %s92, %s93
      %p97 = pneg %p91
      %p98 = scmp.eq.s32.totalorder %s18, 1
      %p99 = por %p97, %p98
      %p100 = scmp.ne.s32.totalorder %s92, %s95
      %p101 = scmp.eq.s32.totalorder %s18, 0
      %p102 = por %p100, %p101
      %p103 = scmp.ne.s32.totalorder %s92, %s95
      %p104 = scmp.eq.s32.totalorder %s23, 1
      %p105 = por %p103, %p104
      %p106 = scmp.ne.s32.totalorder %s95, %s96
      %p107 = scmp.eq.s32.totalorder %s23, 0
      %p108 = por %p106, %p107
      %p109 = scmp.ne.s32.totalorder %s95, %s96
      %p110 = scmp.eq.s32.totalorder %s24, 1
      %p111 = por %p109, %p110
      %p113 = scmp.ne.s32.totalorder %s96, %s112
      %p114 = scmp.eq.s32.totalorder %s24, 0
      %p115 = por %p113, %p114
      %s116 = ssub.s32 %s26, %s33
      %p117 = scmp.eq.s32.totalorder %s116, 0
      %s119 = sadd.s32 %s118, 1
      %s120 = scalar_select %p117, %s118, %s119
      %p123 = pneg %p117
      %p124 = scmp.eq.s32.totalorder %s18, 1
      %p125 = por %p123, %p124
      %p126 = scmp.ne.s32.totalorder %s118, %s121
      %p127 = scmp.eq.s32.totalorder %s18, 0
      %p128 = por %p126, %p127
      %p129 = scmp.ne.s32.totalorder %s118, %s121
      %p130 = scmp.eq.s32.totalorder %s23, 1
      %p131 = por %p129, %p130
      %p132 = scmp.ne.s32.totalorder %s121, %s122
      %p133 = scmp.eq.s32.totalorder %s23, 0
      %p134 = por %p132, %p133
      %p135 = scmp.ne.s32.totalorder %s121, %s122
      %p136 = scmp.eq.s32.totalorder %s24, 1
      %p137 = por %p135, %p136
      %p139 = scmp.ne.s32.totalorder %s122, %s138
      %p140 = scmp.eq.s32.totalorder %s24, 0
      %p141 = por %p139, %p140
      %s143 = sadd.s32 %s142, 1
      %p146 = scmp.eq.s32.totalorder %s18, 1
      %p147 = scmp.ne.s32.totalorder %s142, %s144
      %p148 = scmp.eq.s32.totalorder %s18, 0
      %p149 = por %p147, %p148
      %p150 = scmp.ne.s32.totalorder %s142, %s144
      %p151 = scmp.eq.s32.totalorder %s23, 1
      %p152 = por %p150, %p151
      %p153 = scmp.ne.s32.totalorder %s144, %s145
      %p154 = scmp.eq.s32.totalorder %s23, 0
      %p155 = por %p153, %p154
      %p156 = scmp.ne.s32.totalorder %s144, %s145
      %p157 = scmp.eq.s32.totalorder %s24, 1
      %p158 = por %p156, %p157
      %p160 = scmp.ne.s32.totalorder %s145, %s159
      %p161 = scmp.eq.s32.totalorder %s24, 0
      %p162 = por %p160, %p161
      %s163 = ssub.s32 %s25, %s37
      %p164 = scmp.eq.s32.totalorder %s163, 0
      %s166 = sadd.s32 %s165, 1
      %s167 = scalar_select %p164, %s165, %s166
      %p170 = pneg %p164
      %p171 = scmp.eq.s32.totalorder %s18, 1
      %p172 = por %p170, %p171
      %p173 = scmp.ne.s32.totalorder %s165, %s168
      %p174 = scmp.eq.s32.totalorder %s18, 0
      %p175 = por %p173, %p174
      %p176 = scmp.ne.s32.totalorder %s165, %s168
      %p177 = scmp.eq.s32.totalorder %s23, 1
      %p178 = por %p176, %p177
      %p179 = scmp.ne.s32.totalorder %s168, %s169
      %p180 = scmp.eq.s32.totalorder %s23, 0
      %p181 = por %p179, %p180
      %p182 = scmp.ne.s32.totalorder %s168, %s169
      %p183 = scmp.eq.s32.totalorder %s24, 1
      %p184 = por %p182, %p183
      %p186 = scmp.ne.s32.totalorder %s169, %s185
      %p187 = scmp.eq.s32.totalorder %s24, 0
      %p188 = por %p186, %p187
      %p189 = scmp.le.s32.totalorder 1, %s18
      %p190 = scmp.lt.s32.totalorder %s18, 3
      %p191 = pnand %p189, %p190
      %p192 = pneg %p191
      // Predicated region
      $region9: #{tpu_custom_call.1} parent=5 // pred_check
        _
      $region10: #{tpu_custom_call.1} parent=5 // pred_check_branch
        %194 = sbr.rel (%p191) target = $region12
      $region11: #{tpu_custom_call.1} parent=5 // pred_region
        %s195 = ssub.s32 %s18, 1
        // Predicated region
        $region13: #{tpu_custom_call.1} parent=11 // pred_check
          %p196 = pneg %p82
        $region14: #{tpu_custom_call.1} parent=11 // pred_check_branch
          %198 = sbr.rel (%p196) target = $region16
        $region15: #{tpu_custom_call.1} parent=11 // pred_region
          %200 = vsyncadd [#allocation7], 0
          %s201 = smul.addr %s28, 8
          %s202 = scalar_lea.hbm %s1, %s201
          %s203 = sshll.u32 %s202, 4
          %s204 = int_to_ptr.hbm [resolvable:$true] %s203
          %s205 = sshll.u32 [#allocation6], 4
          %s206 = int_to_ptr.vmem [resolvable:$true] %s205
          %211 = dma.hbm_to_vmem [thread:$0]  %s204, 2048, %s206, [#allocation7], 128, 128, 8
        $region16: #{tpu_custom_call.1} parent=11 // pred_fallthru
          _
        // Predicated region
        $region17: #{tpu_custom_call.1} parent=11 // pred_check
          %p212 = pneg %p108
        $region18: #{tpu_custom_call.1} parent=11 // pred_check_branch
          %214 = sbr.rel (%p212) target = $region20
        $region19: #{tpu_custom_call.1} parent=11 // pred_region
          %p215 = scmp.lt.s32.totalorder %s28, 0
          %s216 = scalar_select %p215, %s28, 0
          %s217 = scalar_lea.vmem %s2, %s216
        $region20: #{tpu_custom_call.1} parent=11 // pred_fallthru
          _
        // Predicated region
        $region21: #{tpu_custom_call.1} parent=11 // pred_check
          %p218 = pneg %p134
        $region22: #{tpu_custom_call.1} parent=11 // pred_check_branch
          %220 = sbr.rel (%p218) target = $region24
        $region23: #{tpu_custom_call.1} parent=11 // pred_region
          %s221 = smul.u32 16, %s28
          %223 = vsyncadd [#allocation7], 0
          %s224 = smul.addr %s221, 8
          %s225 = scalar_lea.hbm %s3, %s224
          %s226 = sshll.u32 %s225, 4
          %s227 = int_to_ptr.hbm [resolvable:$true] %s226
          %s228 = sshll.u32 [#allocation8], 4
          %s229 = int_to_ptr.vmem [resolvable:$true] %s228
          %234 = dma.hbm_to_vmem [thread:$0]  %s227, 2048, %s229, [#allocation7], 128, 128, 8
        $region24: #{tpu_custom_call.1} parent=11 // pred_fallthru
          _
        // Predicated region
        $region25: #{tpu_custom_call.1} parent=11 // pred_check
          %p235 = pneg %p155
        $region26: #{tpu_custom_call.1} parent=11 // pred_check_branch
          %237 = sbr.rel (%p235) target = $region28
        $region27: #{tpu_custom_call.1} parent=11 // pred_region
          _
        $region28: #{tpu_custom_call.1} parent=11 // pred_fallthru
          _
      $region12: #{tpu_custom_call.1} parent=5 // pred_fallthru
        _
      %p238 = scmp.lt.s32.totalorder %s18, 2
      // Predicated region
      $region29: #{tpu_custom_call.1} parent=5 // pred_check
        %p239 = pneg %p238
      $region30: #{tpu_custom_call.1} parent=5 // pred_check_branch
        %241 = sbr.rel (%p239) target = $region32
      $region31: #{tpu_custom_call.1} parent=5 // pred_region
        // Predicated region
        $region33: #{tpu_custom_call.1} parent=31 // pred_check
          %p242 = pneg %p50
        $region34: #{tpu_custom_call.1} parent=31 // pred_check_branch
          %244 = sbr.rel (%p242) target = $region36
        $region35: #{tpu_custom_call.1} parent=31 // pred_region
          %s245 = sand.u32 %s40, 1
          %s246 = scalar_lea.sflag [#allocation4], %s245
          %s247 = sand.u32 %s40, 1
          %s248 = smul.addr %s247, 8
          %s249 = scalar_lea.vmem [#allocation3], %s248
          %251 = vsyncadd %s246, 0
          %s252 = smul.addr %s25, 8
          %s253 = scalar_lea.hbm %s0, %s252
          %s255 = sshll.u32 %s253, 4
          %s256 = int_to_ptr.hbm [resolvable:$true] %s255
          %s257 = sshll.u32 %s249, 4
          %s258 = int_to_ptr.vmem [resolvable:$true] %s257
          %260 = dma.hbm_to_vmem [thread:$0]  %s256, 128, %s258, %s246
        $region36: #{tpu_custom_call.1} parent=31 // pred_fallthru
          _
      $region32: #{tpu_custom_call.1} parent=5 // pred_fallthru
        _
      %p261 = scmp.le.s32.totalorder 1, %s18
      %p262 = scmp.lt.s32.totalorder %s18, 3
      %p263 = pnand %p261, %p262
      %p264 = pneg %p263
      // Predicated region
      $region37: #{tpu_custom_call.1} parent=5 // pred_check
        _
      $region38: #{tpu_custom_call.1} parent=5 // pred_check_branch
        %266 = sbr.rel (%p263) target = $region40
      $region39: #{tpu_custom_call.1} parent=5 // pred_region
        %s267 = ssub.s32 %s18, 1
        %s268 = sand.u32 %s43, 1
        %s269 = scalar_lea.sflag [#allocation4], %s268
        %s270 = sand.u32 %s43, 1
        %s271 = smul.addr %s270, 8
        %s272 = scalar_lea.vmem [#allocation3], %s271
        // Predicated region
        $region41: #{tpu_custom_call.1} parent=39 // pred_check
          %p273 = pneg %p56
        $region42: #{tpu_custom_call.1} parent=39 // pred_check_branch
          %275 = sbr.rel (%p273) target = $region44
        $region43: #{tpu_custom_call.1} parent=39 // pred_region
          %277 = dma.done %s269, 128
        $region44: #{tpu_custom_call.1} parent=39 // pred_fallthru
          _
        // Predicated region
        $region45: #{tpu_custom_call.1} parent=39 // pred_check
          %p278 = pneg %p82
        $region46: #{tpu_custom_call.1} parent=39 // pred_check_branch
          %280 = sbr.rel (%p278) target = $region48
        $region47: #{tpu_custom_call.1} parent=39 // pred_region
          %282 = dma.done [#allocation7], 2048
        $region48: #{tpu_custom_call.1} parent=39 // pred_fallthru
          _
        // Predicated region
        $region49: #{tpu_custom_call.1} parent=39 // pred_check
          %p283 = pneg %p134
        $region50: #{tpu_custom_call.1} parent=39 // pred_check_branch
          %285 = sbr.rel (%p283) target = $region52
        $region51: #{tpu_custom_call.1} parent=39 // pred_region
          %287 = dma.done [#allocation7], 2048
        $region52: #{tpu_custom_call.1} parent=39 // pred_fallthru
          _
        %s288 = sand.u32 %s43, 1
        %s289 = scalar_lea.sflag [#allocation4], %s288
        %s290 = sand.u32 %s43, 1
        %s291 = smul.addr %s290, 8
        %s292 = scalar_lea.vmem [#allocation3], %s291
        %p293 = pneg %p56
        %p294 = pneg %p53
        %p295 = pneg %p82
        %p296 = pneg %p79
        %p297 = scmp.lt.s32.totalorder %s28, 0
        %s298 = scalar_select %p297, %s28, 0
        %s299 = scalar_lea.vmem %s2, %s298
        %p300 = pneg %p108
        %p301 = pneg %p105
        %p302 = pneg %p134
        %p303 = pneg %p131
        %p304 = pneg %p155
        %p305 = pneg %p152
        %p306 = pneg %p181
        %p307 = pneg %p178
        %s308 = sand.u32 %s168, 1
        %s309 = scalar_lea.sflag [#allocation5], %s308
        %s310 = sand.u32 %s168, 1
        %s311 = smul.addr %s310, 8
        %s312 = scalar_lea.vmem [#allocation9], %s311
        %p313 = scmp.lt.s32.totalorder %s28, 0
        %s314 = scalar_select %p313, %s28, 0
        %s315 = scalar_lea.vmem %s2, %s314
        %s316 = smul.u32 16, %s28
        %p317 = scmp.eq.s32.totalorder %s28, 0
        // Predicated region
        $region53: #{tpu_custom_call.1} parent=39 // pred_check
          %p318 = pneg %p317
        $region54: #{tpu_custom_call.1} parent=39 // pred_check_branch
          %320 = sbr.rel (%p318) target = $region56
        $region55: #{tpu_custom_call.1} parent=39 // pred_region
          %321 = vst [vmem:[#allocation2] sm:$0xff] 0.0
        $region56: #{tpu_custom_call.1} parent=39 // pred_fallthru
          _
        %v322 = vld [vmem:[%s272] sm:$0xff]
        %v323 = vld [vmem:[#allocation6] sm:$0xff]
        %v324 = vld [vmem:[#allocation6 + $0x8] sm:$0xff]
        %v325 = vld [vmem:[#allocation6 + $0x10] sm:$0xff]
        %v326 = vld [vmem:[#allocation6 + $0x18] sm:$0xff]
        %v327 = vld [vmem:[#allocation6 + $0x20] sm:$0xff]
        %v328 = vld [vmem:[#allocation6 + $0x28] sm:$0xff]
        %v329 = vld [vmem:[#allocation6 + $0x30] sm:$0xff]
        %v330 = vld [vmem:[#allocation6 + $0x38] sm:$0xff]
        %v331 = vld [vmem:[#allocation6 + $0x40] sm:$0xff]
        %v332 = vld [vmem:[#allocation6 + $0x48] sm:$0xff]
        %v333 = vld [vmem:[#allocation6 + $0x50] sm:$0xff]
        %v334 = vld [vmem:[#allocation6 + $0x58] sm:$0xff]
        %v335 = vld [vmem:[#allocation6 + $0x60] sm:$0xff]
        %v336 = vld [vmem:[#allocation6 + $0x68] sm:$0xff]
        %v337 = vld [vmem:[#allocation6 + $0x70] sm:$0xff]
        %v338 = vld [vmem:[#allocation6 + $0x78] sm:$0xff]
        %v339 = vld [vmem:[%s315] sm:$0x1]
        %v341 = vperm.slane %v339, 0
        %343 = vmatpush.msra.mxu0 %v338
        %344 = vmatpush.msra.mxu0 %v337
        %345 = vmatpush.msra.mxu0 %v336
        %346 = vmatpush.msra.mxu0 %v335
        %347 = vmatpush.msra.mxu0 %v334
        %348 = vmatpush.msra.mxu0 %v333
        %349 = vmatpush.msra.mxu0 %v332
        %350 = vmatpush.msra.mxu0 %v331
        %351 = vmatpush.msra.mxu0 %v330
        %352 = vmatpush.msra.mxu0 %v329
        %353 = vmatpush.msra.mxu0 %v328
        %354 = vmatpush.msra.mxu0 %v327
        %355 = vmatpush.msra.mxu0 %v326
        %356 = vmatpush.msra.mxu0 %v325
        %357 = vmatpush.msra.mxu0 %v324
        %358 = vmatpush.msra.mxu0 %v323
        %359 = vmatmul.f32.gmra.mxu0 %v322
        %v360 = vpop.f32.mrf.mxu0
        %v361 = vadd.f32 %v341, %v360
        %362 = vdwg.mxu0
        %v363 = vmul.f32 %v361, 0.5
        %v364 = vmul.f32 %v361, 0.70710677
        %v365 = vand.u32 2147483647, %v364
        %v366 = vmul.f32 %v365, 0.3275911
        %v367 = vadd.f32 %v366, 1.0
        %v368 = vrcp.pop %v367
        %v369 = vmul.f32 %v367, %v368
        %v370 = vsub.f32 1.0, %v369
        %v371 = vmul.f32 %v368, %v370
        %v372 = vadd.f32 %v368, %v371
        %vm373 = vweird.f32 %v367
        %vm374 = vweird.f32 %v368
        %vm375 = vmor %vm373, %vm374
        %v376 = vsel %vm375, %v368, %v372
        %v377 = vand.u32 2147483647, %v367
        %vm378 = vcmp.eq.f32.partialorder %v377, 8.507059e+37
        %v379 = vand.u32 %v367, 2147483648
        %v380 = vor.u32 1.1754944e-38, %v379
        %v381 = vsel %vm378, %v380, %v376
        %v382 = vmul.f32 1.0, %v381
        %v383 = vmul.f32 %v382, 1.0614054
        %v384 = vadd.f32 %v383, -1.4531521
        %v385 = vmul.f32 %v384, %v382
        %v386 = vadd.f32 %v385, 1.4214138
        %v387 = vmul.f32 %v386, %v382
        %v388 = vadd.f32 %v387, -0.28449672
        %v389 = vmul.f32 %v388, %v382
        %v390 = vadd.f32 %v389, 0.2548296
        %v391 = vmul.f32 %v390, %v382
        %v392 = vmul.f32 %v365, %v365
        %v393 = vsub.f32 0.0, %v392
        %v394 = vmul.f32 %v393, 1.442695
        %v395 = vpow.pop %v394
        %v396 = vmul.f32 %v391, %v395
        %v397 = vsub.f32 1.0, %v396
        %vm398 = vcmp.ge.f32.partialorder %v364, 0.0
        %v399 = vsub.f32 0.0, %v397
        %v400 = vsel %vm398, %v397, %v399
        %v401 = vadd.f32 %v400, 1.0
        %v402 = vmul.f32 %v363, %v401
        %v403 = vld [vmem:[#allocation2] sm:$0xff]
        %v404 = vld [vmem:[#allocation8] sm:$0xff]
        %v405 = vld [vmem:[#allocation8 + $0x8] sm:$0xff]
        %v406 = vld [vmem:[#allocation8 + $0x10] sm:$0xff]
        %v407 = vld [vmem:[#allocation8 + $0x18] sm:$0xff]
        %v408 = vld [vmem:[#allocation8 + $0x20] sm:$0xff]
        %v409 = vld [vmem:[#allocation8 + $0x28] sm:$0xff]
        %v410 = vld [vmem:[#allocation8 + $0x30] sm:$0xff]
        %v411 = vld [vmem:[#allocation8 + $0x38] sm:$0xff]
        %v412 = vld [vmem:[#allocation8 + $0x40] sm:$0xff]
        %v413 = vld [vmem:[#allocation8 + $0x48] sm:$0xff]
        %v414 = vld [vmem:[#allocation8 + $0x50] sm:$0xff]
        %v415 = vld [vmem:[#allocation8 + $0x58] sm:$0xff]
        %v416 = vld [vmem:[#allocation8 + $0x60] sm:$0xff]
        %v417 = vld [vmem:[#allocation8 + $0x68] sm:$0xff]
        %v418 = vld [vmem:[#allocation8 + $0x70] sm:$0xff]
        %v419 = vld [vmem:[#allocation8 + $0x78] sm:$0xff]
        %420 = vmatpush.msra.mxu0 %v419
        %421 = vmatpush.msra.mxu0 %v418
        %422 = vmatpush.msra.mxu0 %v417
        %423 = vmatpush.msra.mxu0 %v416
        %424 = vmatpush.msra.mxu0 %v415
        %425 = vmatpush.msra.mxu0 %v414
        %426 = vmatpush.msra.mxu0 %v413
        %427 = vmatpush.msra.mxu0 %v412
        %428 = vmatpush.msra.mxu0 %v411
        %429 = vmatpush.msra.mxu0 %v410
        %430 = vmatpush.msra.mxu0 %v409
        %431 = vmatpush.msra.mxu0 %v408
        %432 = vmatpush.msra.mxu0 %v407
        %433 = vmatpush.msra.mxu0 %v406
        %434 = vmatpush.msra.mxu0 %v405
        %435 = vmatpush.msra.mxu0 %v404
        %436 = vmatmul.f32.gmra.mxu0 %v402
        %v437 = vpop.f32.mrf.mxu0
        %v438 = vadd.f32 0.0, %v437
        %439 = vdwg.mxu0
        %v440 = vadd.f32 %v403, %v438
        %441 = vst [vmem:[#allocation2] sm:$0xff] %v440
        // Predicated region
        $region57: #{tpu_custom_call.1} parent=39 // pred_check
          %p442 = pneg %p317
        $region58: #{tpu_custom_call.1} parent=39 // pred_check_branch
          %444 = sbr.rel (%p442) target = $region60
        $region59: #{tpu_custom_call.1} parent=39 // pred_region
          %v445 = vld [vmem:[#allocation2] sm:$0xff]
          %v446 = vld [vmem:[%s4] sm:$0x1]
          %v448 = vperm.slane %v446, 0
          %v450 = vadd.f32 %v445, %v448
          %451 = vst [vmem:[%s312] sm:$0xff] %v450
        $region60: #{tpu_custom_call.1} parent=39 // pred_fallthru
          _
        %s452 = sand.u32 %s168, 1
        %s453 = scalar_lea.sflag [#allocation5], %s452
        %s454 = sand.u32 %s168, 1
        %s455 = smul.addr %s454, 8
        %s456 = scalar_lea.vmem [#allocation9], %s455
        // Predicated region
        $region61: #{tpu_custom_call.1} parent=39 // pred_check
          %p457 = pneg %p178
        $region62: #{tpu_custom_call.1} parent=39 // pred_check_branch
          %459 = sbr.rel (%p457) target = $region64
        $region63: #{tpu_custom_call.1} parent=39 // pred_region
          %461 = vsyncadd %s453, 0
          %s462 = smul.addr %s27, 8
          %s463 = scalar_lea.hbm %s5, %s462
          %s465 = sshll.u32 %s456, 4
          %s466 = int_to_ptr.vmem [resolvable:$true] %s465
          %s467 = sshll.u32 %s463, 4
          %s468 = int_to_ptr.hbm [resolvable:$true] %s467
          %470 = dma.vmem_to_hbm [thread:$0]  %s466, 128, %s468, %s453
        $region64: #{tpu_custom_call.1} parent=39 // pred_fallthru
          _
      $region40: #{tpu_custom_call.1} parent=5 // pred_fallthru
        _
      %p471 = scmp.le.s32.totalorder 2, %s18
      // Predicated region
      $region65: #{tpu_custom_call.1} parent=5 // pred_check
        %p472 = pneg %p471
      $region66: #{tpu_custom_call.1} parent=5 // pred_check_branch
        %474 = sbr.rel (%p472) target = $region68
      $region67: #{tpu_custom_call.1} parent=5 // pred_region
        %s475 = ssub.s32 %s18, 2
        // Predicated region
        $region69: #{tpu_custom_call.1} parent=67 // pred_check
          %p476 = pneg %p184
        $region70: #{tpu_custom_call.1} parent=67 // pred_check_branch
          %478 = sbr.rel (%p476) target = $region72
        $region71: #{tpu_custom_call.1} parent=67 // pred_region
          %s479 = sand.u32 %s169, 1
          %s480 = scalar_lea.sflag [#allocation5], %s479
          %s481 = sand.u32 %s169, 1
          %s482 = smul.addr %s481, 8
          %s483 = scalar_lea.vmem [#allocation9], %s482
          %485 = dma.done %s480, 128
        $region72: #{tpu_custom_call.1} parent=67 // pred_fallthru
          _
      $region68: #{tpu_custom_call.1} parent=5 // pred_fallthru
        _
    $region6: #{tpu_custom_call.1} parent=1 // loop_footer
      %s22 = sadd.s32 1, %s18
    $region7: #{tpu_custom_call.1} parent=1 // loop_footer_branch
      %17 = sbr.rel target = $region3
    $region8: #{tpu_custom_call.1} parent=1 // loop_exit
      _
    %486 = vsyncpa [#allocation4], 1
    %s487 = scalar_lea.sflag [#allocation4], 1
    %488 = vsyncpa %s487, 1
    %489 = vsyncpa [#allocation7], 1
    %490 = vsyncpa [#allocation5], 1
    %s491 = scalar_lea.sflag [#allocation5], 1
    %492 = vsyncpa %s491, 1

</llo_original>
